<compile_context>
chip_gen: v6e
topology: v6e:2x2x1
jax: 0.10.0
libtpu: 0.0.40
codegen_flags: <defaults>
</compile_context>

<pallas_src>
from functools import partial

import jax
import jax.numpy as jnp
from jax import lax
from jax.experimental import pallas as pl
from jax.experimental.pallas import tpu as pltpu


def _round_up(v, m):
    return (v + m - 1) // m * m


def _fused_cnn_block_kernel(x_ref, t_ref, bias_ref, gamma_ref, beta_ref,
                            fold_ref, bcast_ref, out_ref, *,
                            K, OH, stride, G, count, eps):
    """Fused Conv2d + BatchNorm2d (batch stats) + SiLU.

    Grid: (G + 1,), sequential ("arbitrary").
      steps 0..G-1 : conv + bias for B images -> rows [i*B*OH, (i+1)*B*OH) of the
                     VMEM-resident lane-dense output slab.
      step G       : BatchNorm (two-pass mean-centred stats over the resident slab)
                     + SiLU, written in place.

    x_ref:     (B, Hp, Wp*Cin)        lane-dense padded input for this step's images
    t_ref:     (K, Wp*Cin, OW*Cout)   banded (Toeplitz) conv weight, one band per kh
    bias_ref:  (1, OW*Cout)           conv bias tiled across OW
    gamma_ref: (1, Cout), beta_ref: (1, Cout)
    fold_ref:  (OW*Cout, Cout)        lane -> channel folding matrix (tiled identity)
    bcast_ref: (Cout, OW*Cout)        channel -> lane broadcast matrix (fold^T)
    out_ref:   (N*OH, OW*Cout)        resident output slab (constant block index)
    """
    i = pl.program_id(0)
    B = x_ref.shape[0]
    w_cin = x_ref.shape[2]
    lane = out_ref.shape[1]
    rows = B * OH

    @pl.when(i < G)
    def _conv():
        acc = jnp.zeros((rows, lane), jnp.float32)
        for kh in range(K):            # K row-shifted MXU matmuls, no im2col relayouts
            if stride == 1:
                xs = x_ref[:, kh:kh + OH, :]
            else:
                xs = x_ref[:, pl.ds(kh, OH, stride=stride), :]
            xs2 = xs.reshape(rows, w_cin)
            acc = acc + jnp.dot(xs2, t_ref[kh], preferred_element_type=jnp.float32)
        acc = acc + bias_ref[...]
        row0 = pl.multiple_of(i * rows, rows)
        out_ref[pl.ds(row0, rows), :] = acc

    @pl.when(i == G)
    def _bn_silu():
        s = out_ref[...]                                               # (N*OH, lane) f32
        inv_count = 1.0 / count
        col_sum = jnp.sum(s, axis=0, keepdims=True)                    # (1, lane)
        mean_c = jnp.dot(col_sum, fold_ref[...],
                         preferred_element_type=jnp.float32) * inv_count   # (1, Cout)
        mean_lane = jnp.dot(mean_c, bcast_ref[...],
                            preferred_element_type=jnp.float32)            # (1, lane)
        d = s - mean_lane                               # centred -> no E[x^2]-E[x]^2 cancellation
        sq_sum = jnp.sum(d * d, axis=0, keepdims=True)                 # (1, lane)
        var_c = jnp.dot(sq_sum, fold_ref[...],
                        preferred_element_type=jnp.float32) * inv_count    # (1, Cout)
        scale_c = gamma_ref[...] * lax.rsqrt(var_c + eps)
        shift_c = beta_ref[...] - mean_c * scale_c
        scale_lane = jnp.dot(scale_c, bcast_ref[...], preferred_element_type=jnp.float32)
        shift_lane = jnp.dot(shift_c, bcast_ref[...], preferred_element_type=jnp.float32)
        z = s * scale_lane + shift_lane
        out_ref[...] = (z * jax.nn.sigmoid(z)).astype(out_ref.dtype)


def cnn_block(x_nchw, w_oihw, bias, gamma, beta, *, stride, padding, eps=1e-5,
              images_per_step=None):
    """Pallas CNNBlock forward. Inputs/weights in PyTorch conventions (NCHW / OIHW)."""
    N, Cin, H, W = x_nchw.shape
    Cout, Cin_w, K, K2 = w_oihw.shape
    assert K == K2
    assert Cin_w == Cin, "groups > 1 not implemented"  # TODO(synk): grouped conv.

    OH = (H + 2 * padding - K) // stride + 1
    OW = (W + 2 * padding - K) // stride + 1
    Hp, Wp = H + 2 * padding, W + 2 * padding
    w_cin = Wp * Cin
    lane = OW * Cout
    # Lane-dense output is the biggest store-side lever; if lane % 128 != 0 the kernel
    # stays correct but degrades to masked partial stores (e.g. the stride=2 case).

    # ---- images per conv step: keep the double-buffered input tile small (~<=1 MiB) --
    per_image_bytes = _round_up(Hp, 8) * _round_up(w_cin, 128) * 4
    if images_per_step is None:
        B = 1
        for cand in range(1, N + 1):
            if N % cand == 0 and cand * per_image_bytes <= (1 << 20):
                B = cand
    else:
        B = images_per_step
    assert N % B == 0
    G = N // B

    # ---- layout plumbing (XLA side) --------------------------------------------------
    # NCHW -> channels-last -> spatial pad -> flatten (W, Cin) into the lane dim.
    x = jnp.transpose(x_nchw, (0, 2, 3, 1)).astype(jnp.float32)
    x = jnp.pad(x, ((0, 0), (padding, padding), (padding, padding), (0, 0)))
    x2 = x.reshape(N, Hp, w_cin)

    # Banded (Toeplitz) weight: T[kh, w*Cin + c, ow*Cout + o] = W[o, c, kh, kw] where
    # w = ow*stride + kw (zero elsewhere).  One (w_cin, lane) MXU matmul per kh.
    wt = jnp.transpose(w_oihw, (2, 3, 1, 0)).astype(jnp.float32)       # (K, K, Cin, Cout)
    w_pos = jnp.arange(Wp)[None, None, :]
    ow_pos = jnp.arange(OW)[None, :, None]
    kw_pos = jnp.arange(K)[:, None, None]
    sel = (w_pos == ow_pos * stride + kw_pos).astype(jnp.float32)      # (K, OW, Wp)
    T = jnp.einsum("xnw,hxco->hwcno", sel, wt).reshape(K, w_cin, lane)

    bias_lane = jnp.tile(bias.astype(jnp.float32), OW).reshape(1, lane)
    gamma2 = gamma.astype(jnp.float32).reshape(1, Cout)
    beta2 = beta.astype(jnp.float32).reshape(1, Cout)
    fold = jnp.tile(jnp.eye(Cout, dtype=jnp.float32), (OW, 1))         # (lane, Cout)
    bcast = jnp.transpose(fold)                                        # (Cout, lane)

    # ---- VMEM budget: derived from the actual footprint, capped at v7x's 64 MiB ------
    x_tile = B * per_image_bytes
    t_tile = K * _round_up(w_cin, 8) * _round_up(lane, 128) * 4
    out_tile = _round_up(N * OH, 8) * _round_up(lane, 128) * 4
    small = (8 * _round_up(lane, 128) * 2 + 2 * 8 * _round_up(Cout, 128)
             + _round_up(lane, 8) * _round_up(Cout, 128)
             + 8 * _round_up(lane, 128)) * 4
    est = 2 * (x_tile + t_tile + out_tile + small)      # worst-case double buffering
    # TODO(synk): for huge N*OH*OW, fall back to a two-pass tiled pipeline instead of a
    #             fully VMEM-resident slab.
    assert est <= (48 << 20), "conv/BN slab too large for single-call VMEM-resident fusion"
    vmem_limit = int(min(64 << 20, max(8 << 20, 2 * est)))

    kernel = partial(_fused_cnn_block_kernel, K=K, OH=OH, stride=stride, G=G,
                     count=float(N * OH * OW), eps=float(eps))

    out2d = pl.pallas_call(
        kernel,
        out_shape=jax.ShapeDtypeStruct((N * OH, lane), jnp.float32),
        grid=(G + 1,),
        in_specs=[
            # Input block for the conv steps; the epilogue step re-uses the previous
            # block index so no extra DMA is issued for it.
            pl.BlockSpec((B, Hp, w_cin), lambda i: (jnp.minimum(i, G - 1), 0, 0)),
            pl.BlockSpec((K, w_cin, lane), lambda i: (0, 0, 0)),
            pl.BlockSpec((1, lane), lambda i: (0, 0)),
            pl.BlockSpec((1, Cout), lambda i: (0, 0)),
            pl.BlockSpec((1, Cout), lambda i: (0, 0)),
            pl.BlockSpec((lane, Cout), lambda i: (0, 0)),
            pl.BlockSpec((Cout, lane), lambda i: (0, 0)),
        ],
        # Constant block index: the whole slab stays VMEM-resident across the grid and
        # is written back to HBM exactly once, after the in-place BN+SiLU epilogue.
        out_specs=pl.BlockSpec((N * OH, lane), lambda i: (0, 0)),
        compiler_params=pltpu.CompilerParams(
            dimension_semantics=("arbitrary",),   # sequential: conv steps then epilogue
            vmem_limit_bytes=vmem_limit,
        ),
    )(x2, T, bias_lane, gamma2, beta2, fold, bcast)

    out_nhwc = out2d.reshape(N, OH, OW, Cout)
    return jnp.transpose(out_nhwc, (0, 3, 1, 2))


def _reference(x_nchw, w_oihw, bias, gamma, beta, *, stride, padding, eps=1e-5):
    conv = lax.conv_general_dilated(
        x_nchw, w_oihw,
        window_strides=(stride, stride),
        padding=[(padding, padding), (padding, padding)],
        dimension_numbers=("NCHW", "OIHW", "NCHW"),
    ) + bias[None, :, None, None]
    mean = jnp.mean(conv, axis=(0, 2, 3), keepdims=True)
    var = jnp.mean(jnp.square(conv - mean), axis=(0, 2, 3), keepdims=True)
    y = (conv - mean) * lax.rsqrt(var + eps)
    y = y * gamma[None, :, None, None] + beta[None, :, None, None]
    return y * jax.nn.sigmoid(y)


if __name__ == "__main__":
    key = jax.random.PRNGKey(0)
    k1, k2, k3, k4, k5 = jax.random.split(key, 5)

    # Small shapes consistent with the module: in_channels=4, out_channels=8, k=3.
    N, Cin, H, W = 2, 4, 16, 16
    Cout, K = 8, 3

    x = jax.random.normal(k1, (N, Cin, H, W), jnp.float32)
    w = 0.1 * jax.random.normal(k2, (Cout, Cin, K, K), jnp.float32)
    b = 0.1 * jax.random.normal(k3, (Cout,), jnp.float32)
    gamma = 1.0 + 0.1 * jax.random.normal(k4, (Cout,), jnp.float32)
    beta = 0.1 * jax.random.normal(k5, (Cout,), jnp.float32)

    # stride=1 (lane-dense 128 output) and stride=2 (exercises the strided-row path).
    for stride, padding in ((1, 1), (2, 1)):
        y = cnn_block(x, w, b, gamma, beta, stride=stride, padding=padding)
        jax.block_until_ready(y)
        y_ref = _reference(x, w, b, gamma, beta, stride=stride, padding=padding)
        assert y.shape == y_ref.shape
        err = float(jnp.max(jnp.abs(y - y_ref)))
        assert jnp.allclose(y, y_ref, atol=2e-4, rtol=2e-4), (stride, err)

    print("KERNEL_OK")
</pallas_src>

<mosaic_0001>
module attributes {stable_mosaic.version = 11 : i64} {
  func.func @_fused_cnn_block_kernel(%arg0: i32, %arg1: memref<2x18x72xf32, #tpu.memory_space<vmem>>, %arg2: memref<3x72x128xf32, #tpu.memory_space<vmem>>, %arg3: memref<1x128xf32, #tpu.memory_space<vmem>>, %arg4: memref<1x8xf32, #tpu.memory_space<vmem>>, %arg5: memref<1x8xf32, #tpu.memory_space<vmem>>, %arg6: memref<128x8xf32, #tpu.memory_space<vmem>>, %arg7: memref<8x128xf32, #tpu.memory_space<vmem>>, %arg8: memref<32x128xf32, #tpu.memory_space<vmem>>) attributes {dimension_semantics = [#tpu.dimension_semantics<arbitrary>], iteration_bounds = array<i64: 2>, scalar_prefetch = 0 : i64, scratch_operands = 0 : i64, tpu.core_type = #tpu.core_type<tc>, window_params = [{transform_indices = @transform_0, window_bounds = array<i64: 2, 18, 72>}, {pipeline_mode = #tpu.pipeline_mode<synchronous>, transform_indices = @transform_1, window_bounds = array<i64: 3, 72, 128>}, {pipeline_mode = #tpu.pipeline_mode<synchronous>, transform_indices = @transform_2, window_bounds = array<i64: 1, 128>}, {pipeline_mode = #tpu.pipeline_mode<synchronous>, transform_indices = @transform_3, window_bounds = array<i64: 1, 8>}, {pipeline_mode = #tpu.pipeline_mode<synchronous>, transform_indices = @transform_4, window_bounds = array<i64: 1, 8>}, {pipeline_mode = #tpu.pipeline_mode<synchronous>, transform_indices = @transform_5, window_bounds = array<i64: 128, 8>}, {pipeline_mode = #tpu.pipeline_mode<synchronous>, transform_indices = @transform_6, window_bounds = array<i64: 8, 128>}, {pipeline_mode = #tpu.pipeline_mode<synchronous>, transform_indices = @transform_7, window_bounds = array<i64: 32, 128>}]} {
    %c1_i32 = arith.constant 1 : i32
    %0 = arith.cmpi slt, %arg0, %c1_i32 : i32
    %1 = arith.extui %0 : i1 to i32
    %c0_i32 = arith.constant 0 : i32
    %2 = arith.cmpi ne, %1, %c0_i32 : i32
    scf.if %2 {
      %cst = arith.constant 0.000000e+00 : f32
      %6 = vector.broadcast %cst : f32 to vector<32x128xf32>
      %c0 = arith.constant 0 : index
      %c0_2 = arith.constant 0 : index
      %c0_3 = arith.constant 0 : index
      %7 = vector.load %arg1[%c0, %c0_2, %c0_3] : memref<2x18x72xf32, #tpu.memory_space<vmem>>, vector<2x16x72xf32>
      %8 = vector.shape_cast %7 : vector<2x16x72xf32> to vector<32x72xf32>
      %c0_4 = arith.constant 0 : index
      %c0_5 = arith.constant 0 : index
      %c0_6 = arith.constant 0 : index
      %9 = vector.load %arg2[%c0_4, %c0_5, %c0_6] : memref<3x72x128xf32, #tpu.memory_space<vmem>>, vector<1x72x128xf32>
      %10 = vector.shape_cast %9 : vector<1x72x128xf32> to vector<72x128xf32>
      %cst_7 = arith.constant dense<0.000000e+00> : vector<32x128xf32>
      %11 = tpu.matmul %8, %10, %cst_7 {dimension_numbers = #tpu.dot_dimension_numbers<[1], [0], [0], [1], [0, 0, 1, 1], [], []>} : vector<32x72xf32>, vector<72x128xf32>, vector<32x128xf32> -> vector<32x128xf32>
      %12 = arith.addf %6, %11 : vector<32x128xf32>
      %c0_8 = arith.constant 0 : index
      %c1 = arith.constant 1 : index
      %c0_9 = arith.constant 0 : index
      %13 = vector.load %arg1[%c0_8, %c1, %c0_9] : memref<2x18x72xf32, #tpu.memory_space<vmem>>, vector<2x16x72xf32>
      %14 = vector.shape_cast %13 : vector<2x16x72xf32> to vector<32x72xf32>
      %c1_10 = arith.constant 1 : index
      %c0_11 = arith.constant 0 : index
      %c0_12 = arith.constant 0 : index
      %15 = vector.load %arg2[%c1_10, %c0_11, %c0_12] : memref<3x72x128xf32, #tpu.memory_space<vmem>>, vector<1x72x128xf32>
      %16 = vector.shape_cast %15 : vector<1x72x128xf32> to vector<72x128xf32>
      %cst_13 = arith.constant dense<0.000000e+00> : vector<32x128xf32>
      %17 = tpu.matmul %14, %16, %cst_13 {dimension_numbers = #tpu.dot_dimension_numbers<[1], [0], [0], [1], [0, 0, 1, 1], [], []>} : vector<32x72xf32>, vector<72x128xf32>, vector<32x128xf32> -> vector<32x128xf32>
      %18 = arith.addf %12, %17 : vector<32x128xf32>
      %c0_14 = arith.constant 0 : index
      %c2 = arith.constant 2 : index
      %c0_15 = arith.constant 0 : index
      %19 = vector.load %arg1[%c0_14, %c2, %c0_15] : memref<2x18x72xf32, #tpu.memory_space<vmem>>, vector<2x16x72xf32>
      %20 = vector.shape_cast %19 : vector<2x16x72xf32> to vector<32x72xf32>
      %c2_16 = arith.constant 2 : index
      %c0_17 = arith.constant 0 : index
      %c0_18 = arith.constant 0 : index
      %21 = vector.load %arg2[%c2_16, %c0_17, %c0_18] : memref<3x72x128xf32, #tpu.memory_space<vmem>>, vector<1x72x128xf32>
      %22 = vector.shape_cast %21 : vector<1x72x128xf32> to vector<72x128xf32>
      %cst_19 = arith.constant dense<0.000000e+00> : vector<32x128xf32>
      %23 = tpu.matmul %20, %22, %cst_19 {dimension_numbers = #tpu.dot_dimension_numbers<[1], [0], [0], [1], [0, 0, 1, 1], [], []>} : vector<32x72xf32>, vector<72x128xf32>, vector<32x128xf32> -> vector<32x128xf32>
      %24 = arith.addf %18, %23 : vector<32x128xf32>
      %c0_20 = arith.constant 0 : index
      %c0_21 = arith.constant 0 : index
      %25 = vector.load %arg3[%c0_20, %c0_21] : memref<1x128xf32, #tpu.memory_space<vmem>>, vector<1x128xf32>
      %26 = vector.broadcast %25 : vector<1x128xf32> to vector<32x128xf32>
      %27 = arith.addf %24, %26 : vector<32x128xf32>
      %c32_i32 = arith.constant 32 : i32
      %28 = arith.muli %arg0, %c32_i32 : i32
      %29 = tpu.assume_multiple %28, 32 : i32
      %30 = arith.index_cast %29 : i32 to index
      %c0_22 = arith.constant 0 : index
      %31 = vector.load %arg8[%30, %c0_22] : memref<32x128xf32, #tpu.memory_space<vmem>>, vector<32x128xf32>
      tpu.vector_store %arg8[%30, %c0_22], %27 {strides = array<i32>} : memref<32x128xf32, #tpu.memory_space<vmem>>, vector<32x128xf32>,
    } else {
    }
    %c1_i32_0 = arith.constant 1 : i32
    %3 = arith.cmpi eq, %arg0, %c1_i32_0 : i32
    %4 = arith.extui %3 : i1 to i32
    %c0_i32_1 = arith.constant 0 : i32
    %5 = arith.cmpi ne, %4, %c0_i32_1 : i32
    scf.if %5 {
      %c0 = arith.constant 0 : index
      %c0_2 = arith.constant 0 : index
      %6 = vector.load %arg8[%c0, %c0_2] : memref<32x128xf32, #tpu.memory_space<vmem>>, vector<32x128xf32>
      %cst = arith.constant dense<0.000000e+00> : vector<128xf32>
      %7 = vector.multi_reduction <add>, %6, %cst [0] : vector<32x128xf32> to vector<128xf32>
      %8 = vector.shape_cast %7 : vector<128xf32> to vector<1x128xf32>
      %c0_3 = arith.constant 0 : index
      %c0_4 = arith.constant 0 : index
      %9 = vector.load %arg6[%c0_3, %c0_4] : memref<128x8xf32, #tpu.memory_space<vmem>>, vector<128x8xf32>
      %cst_5 = arith.constant dense<0.000000e+00> : vector<1x8xf32>
      %10 = tpu.matmul %8, %9, %cst_5 {dimension_numbers = #tpu.dot_dimension_numbers<[1], [0], [0], [1], [0, 0, 1, 1], [], []>} : vector<1x128xf32>, vector<128x8xf32>, vector<1x8xf32> -> vector<1x8xf32>
      %cst_6 = arith.constant 0.001953125 : f32
      %11 = vector.broadcast %cst_6 : f32 to vector<1x8xf32>
      %12 = arith.mulf %10, %11 : vector<1x8xf32>
      %c0_7 = arith.constant 0 : index
      %c0_8 = arith.constant 0 : index
      %13 = vector.load %arg7[%c0_7, %c0_8] : memref<8x128xf32, #tpu.memory_space<vmem>>, vector<8x128xf32>
      %cst_9 = arith.constant dense<0.000000e+00> : vector<1x128xf32>
      %14 = tpu.matmul %12, %13, %cst_9 {dimension_numbers = #tpu.dot_dimension_numbers<[1], [0], [0], [1], [0, 0, 1, 1], [], []>} : vector<1x8xf32>, vector<8x128xf32>, vector<1x128xf32> -> vector<1x128xf32>
      %15 = vector.broadcast %14 : vector<1x128xf32> to vector<32x128xf32>
      %16 = arith.subf %6, %15 : vector<32x128xf32>
      %17 = arith.mulf %16, %16 : vector<32x128xf32>
      %cst_10 = arith.constant dense<0.000000e+00> : vector<128xf32>
      %18 = vector.multi_reduction <add>, %17, %cst_10 [0] : vector<32x128xf32> to vector<128xf32>
      %19 = vector.shape_cast %18 : vector<128xf32> to vector<1x128xf32>
      %c0_11 = arith.constant 0 : index
      %c0_12 = arith.constant 0 : index
      %20 = vector.load %arg6[%c0_11, %c0_12] : memref<128x8xf32, #tpu.memory_space<vmem>>, vector<128x8xf32>
      %cst_13 = arith.constant dense<0.000000e+00> : vector<1x8xf32>
      %21 = tpu.matmul %19, %20, %cst_13 {dimension_numbers = #tpu.dot_dimension_numbers<[1], [0], [0], [1], [0, 0, 1, 1], [], []>} : vector<1x128xf32>, vector<128x8xf32>, vector<1x8xf32> -> vector<1x8xf32>
      %cst_14 = arith.constant 0.001953125 : f32
      %22 = vector.broadcast %cst_14 : f32 to vector<1x8xf32>
      %23 = arith.mulf %21, %22 : vector<1x8xf32>
      %c0_15 = arith.constant 0 : index
      %c0_16 = arith.constant 0 : index
      %24 = vector.load %arg4[%c0_15, %c0_16] : memref<1x8xf32, #tpu.memory_space<vmem>>, vector<1x8xf32>
      %cst_17 = arith.constant 9.99999974E-6 : f32
      %25 = vector.broadcast %cst_17 : f32 to vector<1x8xf32>
      %26 = arith.addf %23, %25 : vector<1x8xf32>
      %27 = math.rsqrt %26 : vector<1x8xf32>
      %28 = arith.mulf %24, %27 : vector<1x8xf32>
      %c0_18 = arith.constant 0 : index
      %c0_19 = arith.constant 0 : index
      %29 = vector.load %arg5[%c0_18, %c0_19] : memref<1x8xf32, #tpu.memory_space<vmem>>, vector<1x8xf32>
      %30 = arith.mulf %12, %28 : vector<1x8xf32>
      %31 = arith.subf %29, %30 : vector<1x8xf32>
      %c0_20 = arith.constant 0 : index
      %c0_21 = arith.constant 0 : index
      %32 = vector.load %arg7[%c0_20, %c0_21] : memref<8x128xf32, #tpu.memory_space<vmem>>, vector<8x128xf32>
      %cst_22 = arith.constant dense<0.000000e+00> : vector<1x128xf32>
      %33 = tpu.matmul %28, %32, %cst_22 {dimension_numbers = #tpu.dot_dimension_numbers<[1], [0], [0], [1], [0, 0, 1, 1], [], []>} : vector<1x8xf32>, vector<8x128xf32>, vector<1x128xf32> -> vector<1x128xf32>
      %c0_23 = arith.constant 0 : index
      %c0_24 = arith.constant 0 : index
      %34 = vector.load %arg7[%c0_23, %c0_24] : memref<8x128xf32, #tpu.memory_space<vmem>>, vector<8x128xf32>
      %cst_25 = arith.constant dense<0.000000e+00> : vector<1x128xf32>
      %35 = tpu.matmul %31, %34, %cst_25 {dimension_numbers = #tpu.dot_dimension_numbers<[1], [0], [0], [1], [0, 0, 1, 1], [], []>} : vector<1x8xf32>, vector<8x128xf32>, vector<1x128xf32> -> vector<1x128xf32>
      %36 = vector.broadcast %33 : vector<1x128xf32> to vector<32x128xf32>
      %37 = arith.mulf %6, %36 : vector<32x128xf32>
      %38 = vector.broadcast %35 : vector<1x128xf32> to vector<32x128xf32>
      %39 = arith.addf %37, %38 : vector<32x128xf32>
      %40 = arith.negf %39 : vector<32x128xf32>
      %41 = math.exp %40 : vector<32x128xf32>
      %cst_26 = arith.constant 1.000000e+00 : f32
      %42 = vector.broadcast %cst_26 : f32 to vector<32x128xf32>
      %43 = arith.addf %42, %41 : vector<32x128xf32>
      %44 = arith.divf %42, %43 : vector<32x128xf32>
      %45 = arith.mulf %39, %44 : vector<32x128xf32>
      %c0_27 = arith.constant 0 : index
      %c0_28 = arith.constant 0 : index
      %46 = vector.load %arg8[%c0_27, %c0_28] : memref<32x128xf32, #tpu.memory_space<vmem>>, vector<32x128xf32>
      tpu.vector_store %arg8[%c0_27, %c0_28], %45 {strides = array<i32>} : memref<32x128xf32, #tpu.memory_space<vmem>>, vector<32x128xf32>,
    } else {
    }
    return
  }
  func.func @transform_0(%arg0: i32) -> (i32, i32, i32) {
    %c0_i32 = arith.constant 0 : i32
    %0 = arith.minsi %arg0, %c0_i32 : i32
    %c0_i32_0 = arith.constant 0 : i32
    %c0_i32_1 = arith.constant 0 : i32
    %c0_i32_2 = arith.constant 0 : i32
    return %0, %c0_i32_0, %c0_i32_1 : i32, i32, i32
  }
  func.func @transform_1(%arg0: i32) -> (i32, i32, i32) {
    %c0_i32 = arith.constant 0 : i32
    %c0_i32_0 = arith.constant 0 : i32
    %c0_i32_1 = arith.constant 0 : i32
    %c0_i32_2 = arith.constant 0 : i32
    return %c0_i32, %c0_i32_0, %c0_i32_1 : i32, i32, i32
  }
  func.func @transform_2(%arg0: i32) -> (i32, i32) {
    %c0_i32 = arith.constant 0 : i32
    %c0_i32_0 = arith.constant 0 : i32
    %c0_i32_1 = arith.constant 0 : i32
    return %c0_i32, %c0_i32_0 : i32, i32
  }
  func.func @transform_3(%arg0: i32) -> (i32, i32) {
    %c0_i32 = arith.constant 0 : i32
    %c0_i32_0 = arith.constant 0 : i32
    %c0_i32_1 = arith.constant 0 : i32
    return %c0_i32, %c0_i32_0 : i32, i32
  }
  func.func @transform_4(%arg0: i32) -> (i32, i32) {
    %c0_i32 = arith.constant 0 : i32
    %c0_i32_0 = arith.constant 0 : i32
    %c0_i32_1 = arith.constant 0 : i32
    return %c0_i32, %c0_i32_0 : i32, i32
  }
  func.func @transform_5(%arg0: i32) -> (i32, i32) {
    %c0_i32 = arith.constant 0 : i32
    %c0_i32_0 = arith.constant 0 : i32
    %c0_i32_1 = arith.constant 0 : i32
    return %c0_i32, %c0_i32_0 : i32, i32
  }
  func.func @transform_6(%arg0: i32) -> (i32, i32) {
    %c0_i32 = arith.constant 0 : i32
    %c0_i32_0 = arith.constant 0 : i32
    %c0_i32_1 = arith.constant 0 : i32
    return %c0_i32, %c0_i32_0 : i32, i32
  }
  func.func @transform_7(%arg0: i32) -> (i32, i32) {
    %c0_i32 = arith.constant 0 : i32
    %c0_i32_0 = arith.constant 0 : i32
    %c0_i32_1 = arith.constant 0 : i32
    return %c0_i32, %c0_i32_0 : i32, i32
  }
}

</mosaic_0001>

<llo_original>
// kernel: tpu_custom_call.1
$region0: #{tpu_custom_call.1}
  #allocation0 [shape = 'u32[]', space=smem, size = 0x4, offset = 0x4, fixed_abs, tag = 'smem constant byte address 0x4 - core index']
  #allocation1 [shape = 'u32[144,128]{1,0:T(1,128)}', space=vmem, size = 0x12000, scoped, tag = 'internal scratch']
  %s0 = inlined_call_operand.vmem [shape: f32[2,18,72], index: 0, kind: input, shape index: {}]
  %s1 = inlined_call_operand.vmem [shape: f32[3,72,128], index: 1, kind: input, shape index: {}]
  %s2 = inlined_call_operand.vmem [shape: f32[1,128], index: 2, kind: input, shape index: {}]
  %s3 = inlined_call_operand.hbm [shape: f32[1,8], index: 3, kind: input, shape index: {}]
  %s4 = inlined_call_operand.vmem [shape: f32[1,8], index: 4, kind: input, shape index: {}]
  %s5 = inlined_call_operand.vmem [shape: f32[128,8], index: 5, kind: input, shape index: {}]
  %s6 = inlined_call_operand.hbm [shape: f32[8,128], index: 6, kind: input, shape index: {}]
  %s7 = inlined_call_operand.hbm [shape: f32[32,128], index: 7, kind: output, shape index: {}]
  %s8 = sld [smem:[#allocation0]]
  $region77: #{tpu_custom_call.1} parent=0
    _
  %s10 = ssub.s32 1, %s8
  %s11 = scalar_select 0, %s10, %s8
  $region1: #{tpu_custom_call.1} parent=0
    #allocation2 [shape = 'u8[512]{0}', space=vmem, size = 0x400, scoped, tag = 'input window, operand 3, single buffered']
    #allocation3 [shape = 's32[2]{0}', space=sflag, size = 0x8, scoped, tag = 'scoped memory for tpu_custom_call.1']
    #allocation4 [shape = 's32[2]{0}', space=sflag, size = 0x8, scoped, tag = 'scoped memory for tpu_custom_call.1']
    #allocation5 [shape = 'u8[4096]{0}', space=vmem, size = 0x1000, scoped, tag = 'input window, operand 6, single buffered']
    #allocation6 [shape = 's32[1]{0}', space=sflag, size = 0x4, scoped, tag = 'scoped memory for tpu_custom_call.1']
    #allocation7 [shape = 'u8[16384]{0}', space=vmem, size = 0x4000, scoped, tag = 'output window, operand 0, single buffered']
    %12 = vsyncpa [#allocation3], 0
    %13 = vsyncpa [#allocation6], 0
    %14 = vsyncpa [#allocation4], 0
    loop: start=0, step=1, limit=4
    $region2: #{tpu_custom_call.1} parent=1 // loop_pre_header
      _
    $region3: #{tpu_custom_call.1} parent=1 // loop_header
      %s16 = sphi 0, %s20
      %p17 = scmp.ge.s32.totalorder %s16, 4
      %s30 = sphi 0, %s32
      %s33 = sphi 0, %s30
      %s34 = sphi 0, %s33
      %s50 = sphi 0, %s34
      %s54 = sphi 0, %s54
      %s56 = sphi 0, %s54
      %s57 = sphi 0, %s56
      %s71 = sphi 0, %s57
      %s75 = sphi 0, %s75
      %s77 = sphi 0, %s75
      %s78 = sphi 0, %s77
      %s92 = sphi 0, %s78
      %s96 = sphi 0, %s96
      %s98 = sphi 0, %s96
      %s99 = sphi 0, %s98
      %s113 = sphi 0, %s99
      %s117 = sphi 0, %s117
      %s119 = sphi 0, %s117
      %s120 = sphi 0, %s119
      %s134 = sphi 0, %s120
      %s138 = sphi 0, %s138
      %s140 = sphi 0, %s138
      %s141 = sphi 0, %s140
      %s155 = sphi 0, %s141
      %s159 = sphi 0, %s159
      %s161 = sphi 0, %s159
      %s162 = sphi 0, %s161
      %s176 = sphi 0, %s162
      %s180 = sphi 0, %s180
      %s182 = sphi 0, %s180
      %s183 = sphi 0, %s182
      %s197 = sphi 0, %s183
    $region4: #{tpu_custom_call.1} parent=1 // loop_header_branch
      %19 = sbr.rel (%p17) target = $region8
    $region5: #{tpu_custom_call.1} parent=1 // loop_body
      %s21 = ssub.s32 %s16, 1
      %s22 = ssub.s32 %s16, 2
      %s23 = sadd.s32 %s16, 1
      %p24 = scmp.lt.s32.totalorder %s16, 0
      %s25 = scalar_select %p24, %s16, 0
      %p26 = scmp.lt.s32.totalorder %s23, 0
      %s27 = scalar_select %p26, %s23, 0
      %s28 = ssub.s32 %s25, %s27
      %p29 = scmp.eq.s32.totalorder %s28, 0
      %s31 = sadd.s32 %s30, 1
      %s32 = scalar_select %p29, %s30, %s31
      %p35 = pneg %p29
      %p36 = scmp.eq.s32.totalorder %s16, 1
      %p37 = por %p35, %p36
      %p38 = scmp.ne.s32.totalorder %s30, %s33
      %p39 = scmp.eq.s32.totalorder %s16, 0
      %p40 = por %p38, %p39
      %p41 = scmp.ne.s32.totalorder %s30, %s33
      %p42 = scmp.eq.s32.totalorder %s21, 1
      %p43 = por %p41, %p42
      %p44 = scmp.ne.s32.totalorder %s33, %s34
      %p45 = scmp.eq.s32.totalorder %s21, 0
      %p46 = por %p44, %p45
      %p47 = scmp.ne.s32.totalorder %s33, %s34
      %p48 = scmp.eq.s32.totalorder %s22, 1
      %p49 = por %p47, %p48
      %p51 = scmp.ne.s32.totalorder %s34, %s50
      %p52 = scmp.eq.s32.totalorder %s22, 0
      %p53 = por %p51, %p52
      %s55 = sadd.s32 %s54, 1
      %p58 = scmp.eq.s32.totalorder %s16, 1
      %p59 = scmp.ne.s32.totalorder %s54, %s56
      %p60 = scmp.eq.s32.totalorder %s16, 0
      %p61 = por %p59, %p60
      %p62 = scmp.ne.s32.totalorder %s54, %s56
      %p63 = scmp.eq.s32.totalorder %s21, 1
      %p64 = por %p62, %p63
      %p65 = scmp.ne.s32.totalorder %s56, %s57
      %p66 = scmp.eq.s32.totalorder %s21, 0
      %p67 = por %p65, %p66
      %p68 = scmp.ne.s32.totalorder %s56, %s57
      %p69 = scmp.eq.s32.totalorder %s22, 1
      %p70 = por %p68, %p69
      %p72 = scmp.ne.s32.totalorder %s57, %s71
      %p73 = scmp.eq.s32.totalorder %s22, 0
      %p74 = por %p72, %p73
      %s76 = sadd.s32 %s75, 1
      %p79 = scmp.eq.s32.totalorder %s16, 1
      %p80 = scmp.ne.s32.totalorder %s75, %s77
      %p81 = scmp.eq.s32.totalorder %s16, 0
      %p82 = por %p80, %p81
      %p83 = scmp.ne.s32.totalorder %s75, %s77
      %p84 = scmp.eq.s32.totalorder %s21, 1
      %p85 = por %p83, %p84
      %p86 = scmp.ne.s32.totalorder %s77, %s78
      %p87 = scmp.eq.s32.totalorder %s21, 0
      %p88 = por %p86, %p87
      %p89 = scmp.ne.s32.totalorder %s77, %s78
      %p90 = scmp.eq.s32.totalorder %s22, 1
      %p91 = por %p89, %p90
      %p93 = scmp.ne.s32.totalorder %s78, %s92
      %p94 = scmp.eq.s32.totalorder %s22, 0
      %p95 = por %p93, %p94
      %s97 = sadd.s32 %s96, 1
      %p100 = scmp.eq.s32.totalorder %s16, 1
      %p101 = scmp.ne.s32.totalorder %s96, %s98
      %p102 = scmp.eq.s32.totalorder %s16, 0
      %p103 = por %p101, %p102
      %p104 = scmp.ne.s32.totalorder %s96, %s98
      %p105 = scmp.eq.s32.totalorder %s21, 1
      %p106 = por %p104, %p105
      %p107 = scmp.ne.s32.totalorder %s98, %s99
      %p108 = scmp.eq.s32.totalorder %s21, 0
      %p109 = por %p107, %p108
      %p110 = scmp.ne.s32.totalorder %s98, %s99
      %p111 = scmp.eq.s32.totalorder %s22, 1
      %p112 = por %p110, %p111
      %p114 = scmp.ne.s32.totalorder %s99, %s113
      %p115 = scmp.eq.s32.totalorder %s22, 0
      %p116 = por %p114, %p115
      %s118 = sadd.s32 %s117, 1
      %p121 = scmp.eq.s32.totalorder %s16, 1
      %p122 = scmp.ne.s32.totalorder %s117, %s119
      %p123 = scmp.eq.s32.totalorder %s16, 0
      %p124 = por %p122, %p123
      %p125 = scmp.ne.s32.totalorder %s117, %s119
      %p126 = scmp.eq.s32.totalorder %s21, 1
      %p127 = por %p125, %p126
      %p128 = scmp.ne.s32.totalorder %s119, %s120
      %p129 = scmp.eq.s32.totalorder %s21, 0
      %p130 = por %p128, %p129
      %p131 = scmp.ne.s32.totalorder %s119, %s120
      %p132 = scmp.eq.s32.totalorder %s22, 1
      %p133 = por %p131, %p132
      %p135 = scmp.ne.s32.totalorder %s120, %s134
      %p136 = scmp.eq.s32.totalorder %s22, 0
      %p137 = por %p135, %p136
      %s139 = sadd.s32 %s138, 1
      %p142 = scmp.eq.s32.totalorder %s16, 1
      %p143 = scmp.ne.s32.totalorder %s138, %s140
      %p144 = scmp.eq.s32.totalorder %s16, 0
      %p145 = por %p143, %p144
      %p146 = scmp.ne.s32.totalorder %s138, %s140
      %p147 = scmp.eq.s32.totalorder %s21, 1
      %p148 = por %p146, %p147
      %p149 = scmp.ne.s32.totalorder %s140, %s141
      %p150 = scmp.eq.s32.totalorder %s21, 0
      %p151 = por %p149, %p150
      %p152 = scmp.ne.s32.totalorder %s140, %s141
      %p153 = scmp.eq.s32.totalorder %s22, 1
      %p154 = por %p152, %p153
      %p156 = scmp.ne.s32.totalorder %s141, %s155
      %p157 = scmp.eq.s32.totalorder %s22, 0
      %p158 = por %p156, %p157
      %s160 = sadd.s32 %s159, 1
      %p163 = scmp.eq.s32.totalorder %s16, 1
      %p164 = scmp.ne.s32.totalorder %s159, %s161
      %p165 = scmp.eq.s32.totalorder %s16, 0
      %p166 = por %p164, %p165
      %p167 = scmp.ne.s32.totalorder %s159, %s161
      %p168 = scmp.eq.s32.totalorder %s21, 1
      %p169 = por %p167, %p168
      %p170 = scmp.ne.s32.totalorder %s161, %s162
      %p171 = scmp.eq.s32.totalorder %s21, 0
      %p172 = por %p170, %p171
      %p173 = scmp.ne.s32.totalorder %s161, %s162
      %p174 = scmp.eq.s32.totalorder %s22, 1
      %p175 = por %p173, %p174
      %p177 = scmp.ne.s32.totalorder %s162, %s176
      %p178 = scmp.eq.s32.totalorder %s22, 0
      %p179 = por %p177, %p178
      %s181 = sadd.s32 %s180, 1
      %p184 = scmp.eq.s32.totalorder %s16, 1
      %p185 = scmp.ne.s32.totalorder %s180, %s182
      %p186 = scmp.eq.s32.totalorder %s16, 0
      %p187 = por %p185, %p186
      %p188 = scmp.ne.s32.totalorder %s180, %s182
      %p189 = scmp.eq.s32.totalorder %s21, 1
      %p190 = por %p188, %p189
      %p191 = scmp.ne.s32.totalorder %s182, %s183
      %p192 = scmp.eq.s32.totalorder %s21, 0
      %p193 = por %p191, %p192
      %p194 = scmp.ne.s32.totalorder %s182, %s183
      %p195 = scmp.eq.s32.totalorder %s22, 1
      %p196 = por %p194, %p195
      %p198 = scmp.ne.s32.totalorder %s183, %s197
      %p199 = scmp.eq.s32.totalorder %s22, 0
      %p200 = por %p198, %p199
      %p201 = scmp.le.s32.totalorder 1, %s16
      %p202 = scmp.lt.s32.totalorder %s16, 3
      %p203 = pnand %p201, %p202
      %p204 = pneg %p203
      // Predicated region
      $region9: #{tpu_custom_call.1} parent=5 // pred_check
        _
      $region10: #{tpu_custom_call.1} parent=5 // pred_check_branch
        %206 = sbr.rel (%p203) target = $region12
      $region11: #{tpu_custom_call.1} parent=5 // pred_region
        %s207 = ssub.s32 %s16, 1
        // Predicated region
        $region13: #{tpu_custom_call.1} parent=11 // pred_check
          %p208 = pneg %p67
        $region14: #{tpu_custom_call.1} parent=11 // pred_check_branch
          %210 = sbr.rel (%p208) target = $region16
        $region15: #{tpu_custom_call.1} parent=11 // pred_region
          _
        $region16: #{tpu_custom_call.1} parent=11 // pred_fallthru
          _
        // Predicated region
        $region17: #{tpu_custom_call.1} parent=11 // pred_check
          %p211 = pneg %p88
        $region18: #{tpu_custom_call.1} parent=11 // pred_check_branch
          %213 = sbr.rel (%p211) target = $region20
        $region19: #{tpu_custom_call.1} parent=11 // pred_region
          _
        $region20: #{tpu_custom_call.1} parent=11 // pred_fallthru
          _
        // Predicated region
        $region21: #{tpu_custom_call.1} parent=11 // pred_check
          %p214 = pneg %p109
        $region22: #{tpu_custom_call.1} parent=11 // pred_check_branch
          %216 = sbr.rel (%p214) target = $region24
        $region23: #{tpu_custom_call.1} parent=11 // pred_region
          %s218 = ssub.s32 16, 16
          %219 = vsyncadd [#allocation3], %s218
          %s221 = sshll.u32 [#allocation2], 4
          %s222 = int_to_ptr.vmem [resolvable:$true] %s221
          %224 = dma.hbm_to_vmem [thread:$0]  %s3, 16, %s222, [#allocation3]
        $region24: #{tpu_custom_call.1} parent=11 // pred_fallthru
          _
        // Predicated region
        $region25: #{tpu_custom_call.1} parent=11 // pred_check
          %p225 = pneg %p130
        $region26: #{tpu_custom_call.1} parent=11 // pred_check_branch
          %227 = sbr.rel (%p225) target = $region28
        $region27: #{tpu_custom_call.1} parent=11 // pred_region
          _
        $region28: #{tpu_custom_call.1} parent=11 // pred_fallthru
          _
        // Predicated region
        $region29: #{tpu_custom_call.1} parent=11 // pred_check
          %p228 = pneg %p151
        $region30: #{tpu_custom_call.1} parent=11 // pred_check_branch
          %230 = sbr.rel (%p228) target = $region32
        $region31: #{tpu_custom_call.1} parent=11 // pred_region
          _
        $region32: #{tpu_custom_call.1} parent=11 // pred_fallthru
          _
        // Predicated region
        $region33: #{tpu_custom_call.1} parent=11 // pred_check
          %p231 = pneg %p172
        $region34: #{tpu_custom_call.1} parent=11 // pred_check_branch
          %233 = sbr.rel (%p231) target = $region36
        $region35: #{tpu_custom_call.1} parent=11 // pred_region
          %s235 = ssub.s32 128, 128
          %236 = vsyncadd [#allocation6], %s235
          %s238 = sshll.u32 [#allocation5], 4
          %s239 = int_to_ptr.vmem [resolvable:$true] %s238
          %241 = dma.hbm_to_vmem [thread:$0]  %s6, 128, %s239, [#allocation6]
        $region36: #{tpu_custom_call.1} parent=11 // pred_fallthru
          _
      $region12: #{tpu_custom_call.1} parent=5 // pred_fallthru
        _
      %p242 = scmp.lt.s32.totalorder %s16, 2
      // Predicated region
      $region37: #{tpu_custom_call.1} parent=5 // pred_check
        %p243 = pneg %p242
      $region38: #{tpu_custom_call.1} parent=5 // pred_check_branch
        %245 = sbr.rel (%p243) target = $region40
      $region39: #{tpu_custom_call.1} parent=5 // pred_region
        // Predicated region
        $region41: #{tpu_custom_call.1} parent=39 // pred_check
          %p246 = pneg %p40
        $region42: #{tpu_custom_call.1} parent=39 // pred_check_branch
          %248 = sbr.rel (%p246) target = $region44
        $region43: #{tpu_custom_call.1} parent=39 // pred_region
          %p249 = scmp.lt.s32.totalorder %s16, 0
          %s250 = scalar_select %p249, %s16, 0
          %s251 = smul.u32 2, %s250
          %p252 = scmp.lt.s32.totalorder %s251, 1
          %s253 = scalar_select %p252, %s251, 1
          %s254 = smul.addr %s253, 3
          %s255 = smul.addr %s254, 8
          %s256 = scalar_lea.vmem %s0, %s255
          %p257 = scmp.lt.s32.totalorder %s16, 0
          %s258 = scalar_select %p257, %s16, 0
          %s259 = smul.u32 2, %s258
        $region44: #{tpu_custom_call.1} parent=39 // pred_fallthru
          _
      $region40: #{tpu_custom_call.1} parent=5 // pred_fallthru
        _
      %p260 = scmp.le.s32.totalorder 1, %s16
      %p261 = scmp.lt.s32.totalorder %s16, 3
      %p262 = pnand %p260, %p261
      %p263 = pneg %p262
      // Predicated region
      $region45: #{tpu_custom_call.1} parent=5 // pred_check
        _
      $region46: #{tpu_custom_call.1} parent=5 // pred_check_branch
        %265 = sbr.rel (%p262) target = $region48
      $region47: #{tpu_custom_call.1} parent=5 // pred_region
        %s266 = ssub.s32 %s16, 1
        // Predicated region
        $region49: #{tpu_custom_call.1} parent=47 // pred_check
          %p267 = pneg %p109
        $region50: #{tpu_custom_call.1} parent=47 // pred_check_branch
          %269 = sbr.rel (%p267) target = $region52
        $region51: #{tpu_custom_call.1} parent=47 // pred_region
          %270 = dma.done [#allocation3], 16
        $region52: #{tpu_custom_call.1} parent=47 // pred_fallthru
          _
        // Predicated region
        $region53: #{tpu_custom_call.1} parent=47 // pred_check
          %p271 = pneg %p172
        $region54: #{tpu_custom_call.1} parent=47 // pred_check_branch
          %273 = sbr.rel (%p271) target = $region56
        $region55: #{tpu_custom_call.1} parent=47 // pred_region
          %274 = dma.done [#allocation6], 128
        $region56: #{tpu_custom_call.1} parent=47 // pred_fallthru
          _
        %p275 = scmp.lt.s32.totalorder %s21, 0
        %s276 = scalar_select %p275, %s21, 0
        %s277 = smul.u32 2, %s276
        %p278 = scmp.lt.s32.totalorder %s277, 1
        %s279 = scalar_select %p278, %s277, 1
        %s280 = smul.addr %s279, 3
        %s281 = smul.addr %s280, 8
        %s282 = scalar_lea.vmem %s0, %s281
        %p283 = pneg %p46
        %p284 = pneg %p43
        %p285 = pneg %p67
        %p286 = pneg %p64
        %p287 = pneg %p88
        %p288 = pneg %p85
        %p289 = pneg %p109
        %p290 = pneg %p106
        %p291 = pneg %p130
        %p292 = pneg %p127
        %p293 = pneg %p151
        %p294 = pneg %p148
        %p295 = pneg %p172
        %p296 = pneg %p169
        %p297 = pneg %p193
        %p298 = pneg %p190
        %p299 = scmp.lt.s32.totalorder %s21, 0
        %s300 = scalar_select %p299, %s21, 0
        %s301 = smul.u32 2, %s300
        %p302 = scmp.lt.s32.totalorder %s301, 1
        %s303 = scalar_select %p302, %s301, 1
        %s304 = smul.addr %s303, 3
        %s305 = smul.addr %s304, 8
        %s306 = scalar_lea.vmem %s0, %s305
        %p307 = scmp.lt.s32.totalorder %s21, 0
        %s308 = scalar_select %p307, %s21, 0
        %s309 = smul.u32 2, %s308
        %p310 = scmp.lt.s32.totalorder %s21, 1
        // Predicated region
        $region57: #{tpu_custom_call.1} parent=47 // pred_check
          %p311 = pneg %p310
        $region58: #{tpu_custom_call.1} parent=47 // pred_check_branch
          %313 = sbr.rel (%p311) target = $region60
        $region59: #{tpu_custom_call.1} parent=47 // pred_region
          %v314 = vld [vmem:[%s306] sm:$0xff]
          %v315 = vld [vmem:[%s306 + $0x8] sm:$0xff]
          %v316 = vld [vmem:[%s306 + $0x18] sm:$0xff]
          %v317 = vld [vmem:[%s306 + $0x20] sm:$0xff]
          %v318 = vld [vmem:[%s1] sm:$0xff]
          %v319 = vld [vmem:[%s1 + $0x8] sm:$0xff]
          %v320 = vld [vmem:[%s1 + $0x10] sm:$0xff]
          %v321 = vld [vmem:[%s1 + $0x18] sm:$0xff]
          %v322 = vld [vmem:[%s1 + $0x20] sm:$0xff]
          %v323 = vld [vmem:[%s1 + $0x28] sm:$0xff]
          %v324 = vld [vmem:[%s1 + $0x30] sm:$0xff]
          %v325 = vld [vmem:[%s1 + $0x38] sm:$0xff]
          %v326 = vld [vmem:[%s1 + $0x40] sm:$0xff]
          %v327 = vld [vmem:[%s306 + $0x1] sm:$0xff]
          %v328 = vld [vmem:[%s306 + $0x9] sm:$0xff]
          %v329 = vld [vmem:[%s306 + $0x19] sm:$0xff]
          %v330 = vld [vmem:[%s306 + $0x21] sm:$0xff]
          %s331 = scalar_lea.vmem %s1, 72
          %v332 = vld [vmem:[%s331] sm:$0xff]
          %v333 = vld [vmem:[%s331 + $0x8] sm:$0xff]
          %v334 = vld [vmem:[%s331 + $0x10] sm:$0xff]
          %v335 = vld [vmem:[%s331 + $0x18] sm:$0xff]
          %v336 = vld [vmem:[%s331 + $0x20] sm:$0xff]
          %v337 = vld [vmem:[%s331 + $0x28] sm:$0xff]
          %v338 = vld [vmem:[%s331 + $0x30] sm:$0xff]
          %v339 = vld [vmem:[%s331 + $0x38] sm:$0xff]
          %v340 = vld [vmem:[%s331 + $0x40] sm:$0xff]
          %vm341 = vcmask 588800
          %v343 = vsel %vm341, %v327, 0
          %v346 = vsel %vm341, %v328, 0
          %v349 = vsel %vm341, %v329, 0
          %v352 = vsel %vm341, %v330, 0
          %354 = vmatprep.subr.mxu0 0.0
          %355 = vmatpush1.msra.mxu0 0.0
          %356 = vmatprep.subr.mxu0 0.0
          %357 = vmatpush1.msra.mxu0 0.0
          %358 = vmatprep.subr.mxu0 0.0
          %359 = vmatpush1.msra.mxu0 0.0
          %360 = vmatprep.subr.mxu0 0.0
          %361 = vmatpush1.msra.mxu0 0.0
          %362 = vmatprep.subr.mxu0 0.0
          %363 = vmatpush1.msra.mxu0 0.0
          %364 = vmatprep.subr.mxu0 0.0
          %365 = vmatpush1.msra.mxu0 0.0
          %366 = vmatprep.subr.mxu0 0.0
          %367 = vmatpush1.msra.mxu0 0.0
          %368 = vmatprep.subr.mxu0 0.0
          %369 = vmatpush1.msra.mxu0 %v340
          %370 = vmatprep.subr.mxu0 0.0
          %371 = vmatpush1.msra.mxu0 %v339
          %372 = vmatprep.subr.mxu0 0.0
          %373 = vmatpush1.msra.mxu0 %v338
          %374 = vmatprep.subr.mxu0 0.0
          %375 = vmatpush1.msra.mxu0 %v337
          %376 = vmatprep.subr.mxu0 0.0
          %377 = vmatpush1.msra.mxu0 %v336
          %378 = vmatprep.subr.mxu0 0.0
          %379 = vmatpush1.msra.mxu0 %v335
          %380 = vmatprep.subr.mxu0 0.0
          %381 = vmatpush1.msra.mxu0 %v334
          %382 = vmatprep.subr.mxu0 0.0
          %383 = vmatpush1.msra.mxu0 %v333
          %384 = vmatprep.subr.mxu0 0.0
          %385 = vmatpush1.msra.mxu0 %v332
          %386 = vmatprep.subr.mxu0 0.0
          %387 = vmatpush2.msra.mxu0 0.0
          %388 = vmatprep.subr.mxu0 0.0
          %389 = vmatpush2.msra.mxu0 0.0
          %390 = vmatprep.subr.mxu0 0.0
          %391 = vmatpush2.msra.mxu0 0.0
          %392 = vmatprep.subr.mxu0 0.0
          %393 = vmatpush2.msra.mxu0 0.0
          %394 = vmatprep.subr.mxu0 0.0
          %395 = vmatpush2.msra.mxu0 0.0
          %396 = vmatprep.subr.mxu0 0.0
          %397 = vmatpush2.msra.mxu0 0.0
          %398 = vmatprep.subr.mxu0 0.0
          %399 = vmatpush2.msra.mxu0 0.0
          %400 = vmatprep.subr.mxu0 0.0
          %401 = vmatpush2.msra.mxu0 0.0
          %402 = vmatprep.subr.mxu0 0.0
          %403 = vmatpush2.msra.mxu0 0.0
          %404 = vmatprep.subr.mxu0 0.0
          %405 = vmatpush2.msra.mxu0 0.0
          %406 = vmatprep.subr.mxu0 0.0
          %407 = vmatpush2.msra.mxu0 0.0
          %408 = vmatprep.subr.mxu0 0.0
          %409 = vmatpush2.msra.mxu0 0.0
          %410 = vmatprep.subr.mxu0 0.0
          %411 = vmatpush2.msra.mxu0 0.0
          %412 = vmatprep.subr.mxu0 0.0
          %413 = vmatpush2.msra.mxu0 0.0
          %414 = vmatprep.subr.mxu0 0.0
          %415 = vmatpush2.msra.mxu0 0.0
          %416 = vmatprep.subr.mxu0 0.0
          %417 = vmatpush2.msra.mxu0 0.0
          %418 = vmatprep.mubr.f32.mxu0 0.0
          %419 = vmatmul.mubr.f32.gmra.mxu0 %v343
          %v420 = vpop.f32.mrf.mxu0
          %v421 = vadd.f32 0.0, %v420
          %v422 = vpop.f32.mrf.mxu0
          %423 = vmatprep.mubr.f32.mxu0 0.0
          %424 = vmatmul.mubr.f32.gmra.mxu0 %v346
          %v425 = vpop.f32.mrf.mxu0
          %v426 = vadd.f32 0.0, %v425
          %v427 = vpop.f32.mrf.mxu0
          %428 = vmatprep.mubr.f32.mxu0 0.0
          %429 = vmatmul.mubr.f32.gmra.mxu0 %v349
          %v430 = vpop.f32.mrf.mxu0
          %v431 = vadd.f32 0.0, %v430
          %v432 = vpop.f32.mrf.mxu0
          %433 = vmatprep.mubr.f32.mxu0 0.0
          %434 = vmatmul.mubr.f32.gmra.mxu0 %v352
          %v435 = vpop.f32.mrf.mxu0
          %v436 = vadd.f32 0.0, %v435
          %v437 = vpop.f32.mrf.mxu0
          %438 = vdwg.mxu0
          %v440 = vsel %vm341, %v314, 0
          %v443 = vsel %vm341, %v315, 0
          %v446 = vsel %vm341, %v316, 0
          %v449 = vsel %vm341, %v317, 0
          %451 = vmatprep.subr.mxu0 0.0
          %452 = vmatpush1.msra.mxu0 0.0
          %453 = vmatprep.subr.mxu0 0.0
          %454 = vmatpush1.msra.mxu0 0.0
          %455 = vmatprep.subr.mxu0 0.0
          %456 = vmatpush1.msra.mxu0 0.0
          %457 = vmatprep.subr.mxu0 0.0
          %458 = vmatpush1.msra.mxu0 0.0
          %459 = vmatprep.subr.mxu0 0.0
          %460 = vmatpush1.msra.mxu0 0.0
          %461 = vmatprep.subr.mxu0 0.0
          %462 = vmatpush1.msra.mxu0 0.0
          %463 = vmatprep.subr.mxu0 0.0
          %464 = vmatpush1.msra.mxu0 0.0
          %465 = vmatprep.subr.mxu0 0.0
          %466 = vmatpush1.msra.mxu0 %v326
          %467 = vmatprep.subr.mxu0 0.0
          %468 = vmatpush1.msra.mxu0 %v325
          %469 = vmatprep.subr.mxu0 0.0
          %470 = vmatpush1.msra.mxu0 %v324
          %471 = vmatprep.subr.mxu0 0.0
          %472 = vmatpush1.msra.mxu0 %v323
          %473 = vmatprep.subr.mxu0 0.0
          %474 = vmatpush1.msra.mxu0 %v322
          %475 = vmatprep.subr.mxu0 0.0
          %476 = vmatpush1.msra.mxu0 %v321
          %477 = vmatprep.subr.mxu0 0.0
          %478 = vmatpush1.msra.mxu0 %v320
          %479 = vmatprep.subr.mxu0 0.0
          %480 = vmatpush1.msra.mxu0 %v319
          %481 = vmatprep.subr.mxu0 0.0
          %482 = vmatpush1.msra.mxu0 %v318
          %483 = vmatprep.subr.mxu0 0.0
          %484 = vmatpush2.msra.mxu0 0.0
          %485 = vmatprep.subr.mxu0 0.0
          %486 = vmatpush2.msra.mxu0 0.0
          %487 = vmatprep.subr.mxu0 0.0
          %488 = vmatpush2.msra.mxu0 0.0
          %489 = vmatprep.subr.mxu0 0.0
          %490 = vmatpush2.msra.mxu0 0.0
          %491 = vmatprep.subr.mxu0 0.0
          %492 = vmatpush2.msra.mxu0 0.0
          %493 = vmatprep.subr.mxu0 0.0
          %494 = vmatpush2.msra.mxu0 0.0
          %495 = vmatprep.subr.mxu0 0.0
          %496 = vmatpush2.msra.mxu0 0.0
          %497 = vmatprep.subr.mxu0 0.0
          %498 = vmatpush2.msra.mxu0 0.0
          %499 = vmatprep.subr.mxu0 0.0
          %500 = vmatpush2.msra.mxu0 0.0
          %501 = vmatprep.subr.mxu0 0.0
          %502 = vmatpush2.msra.mxu0 0.0
          %503 = vmatprep.subr.mxu0 0.0
          %504 = vmatpush2.msra.mxu0 0.0
          %505 = vmatprep.subr.mxu0 0.0
          %506 = vmatpush2.msra.mxu0 0.0
          %507 = vmatprep.subr.mxu0 0.0
          %508 = vmatpush2.msra.mxu0 0.0
          %509 = vmatprep.subr.mxu0 0.0
          %510 = vmatpush2.msra.mxu0 0.0
          %511 = vmatprep.subr.mxu0 0.0
          %512 = vmatpush2.msra.mxu0 0.0
          %513 = vmatprep.subr.mxu0 0.0
          %514 = vmatpush2.msra.mxu0 0.0
          %515 = vmatprep.mubr.f32.mxu0 0.0
          %516 = vmatmul.mubr.f32.gmra.mxu0 %v440
          %v517 = vpop.f32.mrf.mxu0
          %v518 = vadd.f32 %v421, %v517
          %v519 = vpop.f32.mrf.mxu0
          %520 = vmatprep.mubr.f32.mxu0 0.0
          %521 = vmatmul.mubr.f32.gmra.mxu0 %v443
          %v522 = vpop.f32.mrf.mxu0
          %v523 = vadd.f32 %v426, %v522
          %v524 = vpop.f32.mrf.mxu0
          %525 = vmatprep.mubr.f32.mxu0 0.0
          %526 = vmatmul.mubr.f32.gmra.mxu0 %v446
          %v527 = vpop.f32.mrf.mxu0
          %v528 = vadd.f32 %v431, %v527
          %v529 = vpop.f32.mrf.mxu0
          %530 = vmatprep.mubr.f32.mxu0 0.0
          %531 = vmatmul.mubr.f32.gmra.mxu0 %v449
          %v532 = vpop.f32.mrf.mxu0
          %v533 = vadd.f32 %v436, %v532
          %v534 = vpop.f32.mrf.mxu0
          %535 = vdwg.mxu0
          %v536 = vld [vmem:[%s306 + $0x2] sm:$0xff]
          %v537 = vld [vmem:[%s306 + $0xa] sm:$0xff]
          %v538 = vld [vmem:[%s306 + $0x1a] sm:$0xff]
          %v539 = vld [vmem:[%s306 + $0x22] sm:$0xff]
          %s540 = scalar_lea.vmem %s1, 144
          %v541 = vld [vmem:[%s540] sm:$0xff]
          %v542 = vld [vmem:[%s540 + $0x8] sm:$0xff]
          %v543 = vld [vmem:[%s540 + $0x10] sm:$0xff]
          %v544 = vld [vmem:[%s540 + $0x18] sm:$0xff]
          %v545 = vld [vmem:[%s540 + $0x20] sm:$0xff]
          %v546 = vld [vmem:[%s540 + $0x28] sm:$0xff]
          %v547 = vld [vmem:[%s540 + $0x30] sm:$0xff]
          %v548 = vld [vmem:[%s540 + $0x38] sm:$0xff]
          %v549 = vld [vmem:[%s540 + $0x40] sm:$0xff]
          %v551 = vsel %vm341, %v536, 0
          %v554 = vsel %vm341, %v537, 0
          %v557 = vsel %vm341, %v538, 0
          %v560 = vsel %vm341, %v539, 0
          %562 = vmatprep.subr.mxu0 0.0
          %563 = vmatpush1.msra.mxu0 0.0
          %564 = vmatprep.subr.mxu0 0.0
          %565 = vmatpush1.msra.mxu0 0.0
          %566 = vmatprep.subr.mxu0 0.0
          %567 = vmatpush1.msra.mxu0 0.0
          %568 = vmatprep.subr.mxu0 0.0
          %569 = vmatpush1.msra.mxu0 0.0
          %570 = vmatprep.subr.mxu0 0.0
          %571 = vmatpush1.msra.mxu0 0.0
          %572 = vmatprep.subr.mxu0 0.0
          %573 = vmatpush1.msra.mxu0 0.0
          %574 = vmatprep.subr.mxu0 0.0
          %575 = vmatpush1.msra.mxu0 0.0
          %576 = vmatprep.subr.mxu0 0.0
          %577 = vmatpush1.msra.mxu0 %v549
          %578 = vmatprep.subr.mxu0 0.0
          %579 = vmatpush1.msra.mxu0 %v548
          %580 = vmatprep.subr.mxu0 0.0
          %581 = vmatpush1.msra.mxu0 %v547
          %582 = vmatprep.subr.mxu0 0.0
          %583 = vmatpush1.msra.mxu0 %v546
          %584 = vmatprep.subr.mxu0 0.0
          %585 = vmatpush1.msra.mxu0 %v545
          %586 = vmatprep.subr.mxu0 0.0
          %587 = vmatpush1.msra.mxu0 %v544
          %588 = vmatprep.subr.mxu0 0.0
          %589 = vmatpush1.msra.mxu0 %v543
          %590 = vmatprep.subr.mxu0 0.0
          %591 = vmatpush1.msra.mxu0 %v542
          %592 = vmatprep.subr.mxu0 0.0
          %593 = vmatpush1.msra.mxu0 %v541
          %594 = vmatprep.subr.mxu0 0.0
          %595 = vmatpush2.msra.mxu0 0.0
          %596 = vmatprep.subr.mxu0 0.0
          %597 = vmatpush2.msra.mxu0 0.0
          %598 = vmatprep.subr.mxu0 0.0
          %599 = vmatpush2.msra.mxu0 0.0
          %600 = vmatprep.subr.mxu0 0.0
          %601 = vmatpush2.msra.mxu0 0.0
          %602 = vmatprep.subr.mxu0 0.0
          %603 = vmatpush2.msra.mxu0 0.0
          %604 = vmatprep.subr.mxu0 0.0
          %605 = vmatpush2.msra.mxu0 0.0
          %606 = vmatprep.subr.mxu0 0.0
          %607 = vmatpush2.msra.mxu0 0.0
          %608 = vmatprep.subr.mxu0 0.0
          %609 = vmatpush2.msra.mxu0 0.0
          %610 = vmatprep.subr.mxu0 0.0
          %611 = vmatpush2.msra.mxu0 0.0
          %612 = vmatprep.subr.mxu0 0.0
          %613 = vmatpush2.msra.mxu0 0.0
          %614 = vmatprep.subr.mxu0 0.0
          %615 = vmatpush2.msra.mxu0 0.0
          %616 = vmatprep.subr.mxu0 0.0
          %617 = vmatpush2.msra.mxu0 0.0
          %618 = vmatprep.subr.mxu0 0.0
          %619 = vmatpush2.msra.mxu0 0.0
          %620 = vmatprep.subr.mxu0 0.0
          %621 = vmatpush2.msra.mxu0 0.0
          %622 = vmatprep.subr.mxu0 0.0
          %623 = vmatpush2.msra.mxu0 0.0
          %624 = vmatprep.subr.mxu0 0.0
          %625 = vmatpush2.msra.mxu0 0.0
          %626 = vmatprep.mubr.f32.mxu0 0.0
          %627 = vmatmul.mubr.f32.gmra.mxu0 %v551
          %v628 = vpop.f32.mrf.mxu0
          %v629 = vadd.f32 0.0, %v628
          %v630 = vpop.f32.mrf.mxu0
          %631 = vmatprep.mubr.f32.mxu0 0.0
          %632 = vmatmul.mubr.f32.gmra.mxu0 %v554
          %v633 = vpop.f32.mrf.mxu0
          %v634 = vadd.f32 0.0, %v633
          %v635 = vpop.f32.mrf.mxu0
          %636 = vmatprep.mubr.f32.mxu0 0.0
          %637 = vmatmul.mubr.f32.gmra.mxu0 %v557
          %v638 = vpop.f32.mrf.mxu0
          %v639 = vadd.f32 0.0, %v638
          %v640 = vpop.f32.mrf.mxu0
          %641 = vmatprep.mubr.f32.mxu0 0.0
          %642 = vmatmul.mubr.f32.gmra.mxu0 %v560
          %v643 = vpop.f32.mrf.mxu0
          %v644 = vadd.f32 0.0, %v643
          %v645 = vpop.f32.mrf.mxu0
          %646 = vdwg.mxu0
          %v647 = vadd.f32 %v518, %v629
          %v648 = vadd.f32 %v523, %v634
          %v649 = vadd.f32 %v528, %v639
          %v650 = vadd.f32 %v533, %v644
          %v651 = vld [vmem:[%s2] sm:$0x1]
          %v653 = vlaneseq
          %v654 = vshrl.u32 %v653, 7
          %v655 = vsub.s32 0, %v654
          %v656 = vrot.slane %v651, %v655
          %v658 = vadd.f32 %v647, %v656
          %v659 = vadd.f32 %v648, %v656
          %v660 = vadd.f32 %v649, %v656
          %v661 = vadd.f32 %v650, %v656
          %s662 = smul.u32 %s21, 32
          %s663 = scalar_lea.vmem [#allocation7], %s662
          %664 = vst [vmem:[%s663] sm:$0xff] %v658
          %665 = vst [vmem:[%s663 + $0x8] sm:$0xff] %v659
          %666 = vst [vmem:[%s663 + $0x10] sm:$0xff] %v660
          %667 = vst [vmem:[%s663 + $0x18] sm:$0xff] %v661
        $region60: #{tpu_custom_call.1} parent=47 // pred_fallthru
          _
        %p668 = scmp.eq.s32.totalorder %s21, 1
        // Predicated region
        $region61: #{tpu_custom_call.1} parent=47 // pred_check
          %p669 = pneg %p668
        $region62: #{tpu_custom_call.1} parent=47 // pred_check_branch
          %671 = sbr.rel (%p669) target = $region64
        $region63: #{tpu_custom_call.1} parent=47 // pred_region
          %v672 = vld [vmem:[#allocation7] sm:$0xff]
          %v673 = vld [vmem:[#allocation7 + $0x8] sm:$0xff]
          %v674 = vld [vmem:[#allocation7 + $0x10] sm:$0xff]
          %v675 = vld [vmem:[#allocation7 + $0x18] sm:$0xff]
          %v676 = vadd.f32 %v672, %v673
          %v677 = vadd.f32 %v676, %v674
          %v678 = vadd.f32 %v677, %v675
          %v679 = vrot.slane %v678, 4
          %v680 = vadd.f32 %v678, %v679
          %v681 = vrot.slane %v680, 2
          %v682 = vadd.f32 %v680, %v681
          %v683 = vrot.slane %v682, 1
          %v684 = vadd.f32 %v682, %v683
          %v685 = vld [vmem:[%s5] sm:$0xff]
          %v686 = vld [vmem:[%s5 + $0x8] sm:$0xff]
          %v687 = vld [vmem:[%s5 + $0x10] sm:$0xff]
          %v688 = vld [vmem:[%s5 + $0x18] sm:$0xff]
          %v689 = vld [vmem:[%s5 + $0x20] sm:$0xff]
          %v690 = vld [vmem:[%s5 + $0x28] sm:$0xff]
          %v691 = vld [vmem:[%s5 + $0x30] sm:$0xff]
          %v692 = vld [vmem:[%s5 + $0x38] sm:$0xff]
          %v693 = vld [vmem:[%s5 + $0x40] sm:$0xff]
          %v694 = vld [vmem:[%s5 + $0x48] sm:$0xff]
          %v695 = vld [vmem:[%s5 + $0x50] sm:$0xff]
          %v696 = vld [vmem:[%s5 + $0x58] sm:$0xff]
          %v697 = vld [vmem:[%s5 + $0x60] sm:$0xff]
          %v698 = vld [vmem:[%s5 + $0x68] sm:$0xff]
          %v699 = vld [vmem:[%s5 + $0x70] sm:$0xff]
          %v700 = vld [vmem:[%s5 + $0x78] sm:$0xff]
          %701 = vmatprep.subr.mxu0 0.0
          %702 = vmatpush1.msra.mxu0 %v700
          %703 = vmatprep.subr.mxu0 0.0
          %704 = vmatpush1.msra.mxu0 %v699
          %705 = vmatprep.subr.mxu0 0.0
          %706 = vmatpush1.msra.mxu0 %v698
          %707 = vmatprep.subr.mxu0 0.0
          %708 = vmatpush1.msra.mxu0 %v697
          %709 = vmatprep.subr.mxu0 0.0
          %710 = vmatpush1.msra.mxu0 %v696
          %711 = vmatprep.subr.mxu0 0.0
          %712 = vmatpush1.msra.mxu0 %v695
          %713 = vmatprep.subr.mxu0 0.0
          %714 = vmatpush1.msra.mxu0 %v694
          %715 = vmatprep.subr.mxu0 0.0
          %716 = vmatpush1.msra.mxu0 %v693
          %717 = vmatprep.subr.mxu0 0.0
          %718 = vmatpush1.msra.mxu0 %v692
          %719 = vmatprep.subr.mxu0 0.0
          %720 = vmatpush1.msra.mxu0 %v691
          %721 = vmatprep.subr.mxu0 0.0
          %722 = vmatpush1.msra.mxu0 %v690
          %723 = vmatprep.subr.mxu0 0.0
          %724 = vmatpush1.msra.mxu0 %v689
          %725 = vmatprep.subr.mxu0 0.0
          %726 = vmatpush1.msra.mxu0 %v688
          %727 = vmatprep.subr.mxu0 0.0
          %728 = vmatpush1.msra.mxu0 %v687
          %729 = vmatprep.subr.mxu0 0.0
          %730 = vmatpush1.msra.mxu0 %v686
          %731 = vmatprep.subr.mxu0 0.0
          %732 = vmatpush1.msra.mxu0 %v685
          %733 = vmatprep.subr.mxu0 0.0
          %734 = vmatpush2.msra.mxu0 0.0
          %735 = vmatprep.subr.mxu0 0.0
          %736 = vmatpush2.msra.mxu0 0.0
          %737 = vmatprep.subr.mxu0 0.0
          %738 = vmatpush2.msra.mxu0 0.0
          %739 = vmatprep.subr.mxu0 0.0
          %740 = vmatpush2.msra.mxu0 0.0
          %741 = vmatprep.subr.mxu0 0.0
          %742 = vmatpush2.msra.mxu0 0.0
          %743 = vmatprep.subr.mxu0 0.0
          %744 = vmatpush2.msra.mxu0 0.0
          %745 = vmatprep.subr.mxu0 0.0
          %746 = vmatpush2.msra.mxu0 0.0
          %747 = vmatprep.subr.mxu0 0.0
          %748 = vmatpush2.msra.mxu0 0.0
          %749 = vmatprep.subr.mxu0 0.0
          %750 = vmatpush2.msra.mxu0 0.0
          %751 = vmatprep.subr.mxu0 0.0
          %752 = vmatpush2.msra.mxu0 0.0
          %753 = vmatprep.subr.mxu0 0.0
          %754 = vmatpush2.msra.mxu0 0.0
          %755 = vmatprep.subr.mxu0 0.0
          %756 = vmatpush2.msra.mxu0 0.0
          %757 = vmatprep.subr.mxu0 0.0
          %758 = vmatpush2.msra.mxu0 0.0
          %759 = vmatprep.subr.mxu0 0.0
          %760 = vmatpush2.msra.mxu0 0.0
          %761 = vmatprep.subr.mxu0 0.0
          %762 = vmatpush2.msra.mxu0 0.0
          %763 = vmatprep.subr.mxu0 0.0
          %764 = vmatpush2.msra.mxu0 0.0
          %765 = vmatprep.mubr.f32.mxu0 0.0
          %766 = vmatmul.mubr.f32.gmra.mxu0 %v684
          %v767 = vpop.f32.mrf.mxu0
          %v768 = vadd.f32 0.0, %v767
          %v769 = vpop.f32.mrf.mxu0
          %770 = vdwg.mxu0
          %v771 = vmul.f32 %v768, 0.001953125
          %v772 = vld [vmem:[#allocation5] sm:$0xff]
          %vm773 = vcmask 64512
          %v775 = vsel %vm773, %v771, 0
          %777 = vmatprep.subr.mxu0 0.0
          %778 = vmatpush1.msra.mxu0 0.0
          %779 = vmatprep.subr.mxu0 0.0
          %780 = vmatpush1.msra.mxu0 0.0
          %781 = vmatprep.subr.mxu0 0.0
          %782 = vmatpush1.msra.mxu0 0.0
          %783 = vmatprep.subr.mxu0 0.0
          %784 = vmatpush1.msra.mxu0 0.0
          %785 = vmatprep.subr.mxu0 0.0
          %786 = vmatpush1.msra.mxu0 0.0
          %787 = vmatprep.subr.mxu0 0.0
          %788 = vmatpush1.msra.mxu0 0.0
          %789 = vmatprep.subr.mxu0 0.0
          %790 = vmatpush1.msra.mxu0 0.0
          %791 = vmatprep.subr.mxu0 0.0
          %792 = vmatpush1.msra.mxu0 0.0
          %793 = vmatprep.subr.mxu0 0.0
          %794 = vmatpush1.msra.mxu0 0.0
          %795 = vmatprep.subr.mxu0 0.0
          %796 = vmatpush1.msra.mxu0 0.0
          %797 = vmatprep.subr.mxu0 0.0
          %798 = vmatpush1.msra.mxu0 0.0
          %799 = vmatprep.subr.mxu0 0.0
          %800 = vmatpush1.msra.mxu0 0.0
          %801 = vmatprep.subr.mxu0 0.0
          %802 = vmatpush1.msra.mxu0 0.0
          %803 = vmatprep.subr.mxu0 0.0
          %804 = vmatpush1.msra.mxu0 0.0
          %805 = vmatprep.subr.mxu0 0.0
          %806 = vmatpush1.msra.mxu0 0.0
          %807 = vmatprep.subr.mxu0 0.0
          %808 = vmatpush1.msra.mxu0 %v772
          %809 = vmatprep.subr.mxu0 0.0
          %810 = vmatpush2.msra.mxu0 0.0
          %811 = vmatprep.subr.mxu0 0.0
          %812 = vmatpush2.msra.mxu0 0.0
          %813 = vmatprep.subr.mxu0 0.0
          %814 = vmatpush2.msra.mxu0 0.0
          %815 = vmatprep.subr.mxu0 0.0
          %816 = vmatpush2.msra.mxu0 0.0
          %817 = vmatprep.subr.mxu0 0.0
          %818 = vmatpush2.msra.mxu0 0.0
          %819 = vmatprep.subr.mxu0 0.0
          %820 = vmatpush2.msra.mxu0 0.0
          %821 = vmatprep.subr.mxu0 0.0
          %822 = vmatpush2.msra.mxu0 0.0
          %823 = vmatprep.subr.mxu0 0.0
          %824 = vmatpush2.msra.mxu0 0.0
          %825 = vmatprep.subr.mxu0 0.0
          %826 = vmatpush2.msra.mxu0 0.0
          %827 = vmatprep.subr.mxu0 0.0
          %828 = vmatpush2.msra.mxu0 0.0
          %829 = vmatprep.subr.mxu0 0.0
          %830 = vmatpush2.msra.mxu0 0.0
          %831 = vmatprep.subr.mxu0 0.0
          %832 = vmatpush2.msra.mxu0 0.0
          %833 = vmatprep.subr.mxu0 0.0
          %834 = vmatpush2.msra.mxu0 0.0
          %835 = vmatprep.subr.mxu0 0.0
          %836 = vmatpush2.msra.mxu0 0.0
          %837 = vmatprep.subr.mxu0 0.0
          %838 = vmatpush2.msra.mxu0 0.0
          %839 = vmatprep.subr.mxu0 0.0
          %840 = vmatpush2.msra.mxu0 0.0
          %841 = vmatprep.mubr.f32.mxu0 0.0
          %842 = vmatmul.mubr.f32.gmra.mxu0 %v775
          %v843 = vpop.f32.mrf.mxu0
          %v844 = vadd.f32 0.0, %v843
          %v845 = vpop.f32.mrf.mxu0
          %846 = vdwg.mxu0
          %v847 = vlaneseq
          %v848 = vshrl.u32 %v847, 7
          %v849 = vsub.s32 0, %v848
          %v850 = vrot.slane %v844, %v849
          %v851 = vsub.f32 %v672, %v850
          %v852 = vsub.f32 %v673, %v850
          %v853 = vsub.f32 %v674, %v850
          %v854 = vsub.f32 %v675, %v850
          %v855 = vmul.f32 %v851, %v851
          %v856 = vmul.f32 %v852, %v852
          %v857 = vmul.f32 %v853, %v853
          %v858 = vmul.f32 %v854, %v854
          %v859 = vadd.f32 %v855, %v856
          %v860 = vadd.f32 %v859, %v857
          %v861 = vadd.f32 %v860, %v858
          %v862 = vrot.slane %v861, 4
          %v863 = vadd.f32 %v861, %v862
          %v864 = vrot.slane %v863, 2
          %v865 = vadd.f32 %v863, %v864
          %v866 = vrot.slane %v865, 1
          %v867 = vadd.f32 %v865, %v866
          %868 = vmatprep.subr.mxu0 0.0
          %869 = vmatpush1.msra.mxu0 %v700
          %870 = vmatprep.subr.mxu0 0.0
          %871 = vmatpush1.msra.mxu0 %v699
          %872 = vmatprep.subr.mxu0 0.0
          %873 = vmatpush1.msra.mxu0 %v698
          %874 = vmatprep.subr.mxu0 0.0
          %875 = vmatpush1.msra.mxu0 %v697
          %876 = vmatprep.subr.mxu0 0.0
          %877 = vmatpush1.msra.mxu0 %v696
          %878 = vmatprep.subr.mxu0 0.0
          %879 = vmatpush1.msra.mxu0 %v695
          %880 = vmatprep.subr.mxu0 0.0
          %881 = vmatpush1.msra.mxu0 %v694
          %882 = vmatprep.subr.mxu0 0.0
          %883 = vmatpush1.msra.mxu0 %v693
          %884 = vmatprep.subr.mxu0 0.0
          %885 = vmatpush1.msra.mxu0 %v692
          %886 = vmatprep.subr.mxu0 0.0
          %887 = vmatpush1.msra.mxu0 %v691
          %888 = vmatprep.subr.mxu0 0.0
          %889 = vmatpush1.msra.mxu0 %v690
          %890 = vmatprep.subr.mxu0 0.0
          %891 = vmatpush1.msra.mxu0 %v689
          %892 = vmatprep.subr.mxu0 0.0
          %893 = vmatpush1.msra.mxu0 %v688
          %894 = vmatprep.subr.mxu0 0.0
          %895 = vmatpush1.msra.mxu0 %v687
          %896 = vmatprep.subr.mxu0 0.0
          %897 = vmatpush1.msra.mxu0 %v686
          %898 = vmatprep.subr.mxu0 0.0
          %899 = vmatpush1.msra.mxu0 %v685
          %900 = vmatprep.subr.mxu0 0.0
          %901 = vmatpush2.msra.mxu0 0.0
          %902 = vmatprep.subr.mxu0 0.0
          %903 = vmatpush2.msra.mxu0 0.0
          %904 = vmatprep.subr.mxu0 0.0
          %905 = vmatpush2.msra.mxu0 0.0
          %906 = vmatprep.subr.mxu0 0.0
          %907 = vmatpush2.msra.mxu0 0.0
          %908 = vmatprep.subr.mxu0 0.0
          %909 = vmatpush2.msra.mxu0 0.0
          %910 = vmatprep.subr.mxu0 0.0
          %911 = vmatpush2.msra.mxu0 0.0
          %912 = vmatprep.subr.mxu0 0.0
          %913 = vmatpush2.msra.mxu0 0.0
          %914 = vmatprep.subr.mxu0 0.0
          %915 = vmatpush2.msra.mxu0 0.0
          %916 = vmatprep.subr.mxu0 0.0
          %917 = vmatpush2.msra.mxu0 0.0
          %918 = vmatprep.subr.mxu0 0.0
          %919 = vmatpush2.msra.mxu0 0.0
          %920 = vmatprep.subr.mxu0 0.0
          %921 = vmatpush2.msra.mxu0 0.0
          %922 = vmatprep.subr.mxu0 0.0
          %923 = vmatpush2.msra.mxu0 0.0
          %924 = vmatprep.subr.mxu0 0.0
          %925 = vmatpush2.msra.mxu0 0.0
          %926 = vmatprep.subr.mxu0 0.0
          %927 = vmatpush2.msra.mxu0 0.0
          %928 = vmatprep.subr.mxu0 0.0
          %929 = vmatpush2.msra.mxu0 0.0
          %930 = vmatprep.subr.mxu0 0.0
          %931 = vmatpush2.msra.mxu0 0.0
          %932 = vmatprep.mubr.f32.mxu0 0.0
          %933 = vmatmul.mubr.f32.gmra.mxu0 %v867
          %v934 = vpop.f32.mrf.mxu0
          %v935 = vadd.f32 0.0, %v934
          %v936 = vpop.f32.mrf.mxu0
          %937 = vdwg.mxu0
          %v938 = vmul.f32 %v935, 0.001953125
          %v939 = vld [vmem:[#allocation2] sm:$0x1]
          %v940 = vadd.f32 %v938, 1e-05
          %v941 = vrsqrt.pop %v940
          %v942 = vmul.f32 %v939, %v941
          %v943 = vld [vmem:[%s4] sm:$0x1]
          %v944 = vmul.f32 %v771, %v942
          %v945 = vsub.f32 %v943, %v944
          %v947 = vsel %vm773, %v942, 0
          %949 = vmatprep.subr.mxu0 0.0
          %950 = vmatpush1.msra.mxu0 0.0
          %951 = vmatprep.subr.mxu0 0.0
          %952 = vmatpush1.msra.mxu0 0.0
          %953 = vmatprep.subr.mxu0 0.0
          %954 = vmatpush1.msra.mxu0 0.0
          %955 = vmatprep.subr.mxu0 0.0
          %956 = vmatpush1.msra.mxu0 0.0
          %957 = vmatprep.subr.mxu0 0.0
          %958 = vmatpush1.msra.mxu0 0.0
          %959 = vmatprep.subr.mxu0 0.0
          %960 = vmatpush1.msra.mxu0 0.0
          %961 = vmatprep.subr.mxu0 0.0
          %962 = vmatpush1.msra.mxu0 0.0
          %963 = vmatprep.subr.mxu0 0.0
          %964 = vmatpush1.msra.mxu0 0.0
          %965 = vmatprep.subr.mxu0 0.0
          %966 = vmatpush1.msra.mxu0 0.0
          %967 = vmatprep.subr.mxu0 0.0
          %968 = vmatpush1.msra.mxu0 0.0
          %969 = vmatprep.subr.mxu0 0.0
          %970 = vmatpush1.msra.mxu0 0.0
          %971 = vmatprep.subr.mxu0 0.0
          %972 = vmatpush1.msra.mxu0 0.0
          %973 = vmatprep.subr.mxu0 0.0
          %974 = vmatpush1.msra.mxu0 0.0
          %975 = vmatprep.subr.mxu0 0.0
          %976 = vmatpush1.msra.mxu0 0.0
          %977 = vmatprep.subr.mxu0 0.0
          %978 = vmatpush1.msra.mxu0 0.0
          %979 = vmatprep.subr.mxu0 0.0
          %980 = vmatpush1.msra.mxu0 %v772
          %981 = vmatprep.subr.mxu0 0.0
          %982 = vmatpush2.msra.mxu0 0.0
          %983 = vmatprep.subr.mxu0 0.0
          %984 = vmatpush2.msra.mxu0 0.0
          %985 = vmatprep.subr.mxu0 0.0
          %986 = vmatpush2.msra.mxu0 0.0
          %987 = vmatprep.subr.mxu0 0.0
          %988 = vmatpush2.msra.mxu0 0.0
          %989 = vmatprep.subr.mxu0 0.0
          %990 = vmatpush2.msra.mxu0 0.0
          %991 = vmatprep.subr.mxu0 0.0
          %992 = vmatpush2.msra.mxu0 0.0
          %993 = vmatprep.subr.mxu0 0.0
          %994 = vmatpush2.msra.mxu0 0.0
          %995 = vmatprep.subr.mxu0 0.0
          %996 = vmatpush2.msra.mxu0 0.0
          %997 = vmatprep.subr.mxu0 0.0
          %998 = vmatpush2.msra.mxu0 0.0
          %999 = vmatprep.subr.mxu0 0.0
          %1000 = vmatpush2.msra.mxu0 0.0
          %1001 = vmatprep.subr.mxu0 0.0
          %1002 = vmatpush2.msra.mxu0 0.0
          %1003 = vmatprep.subr.mxu0 0.0
          %1004 = vmatpush2.msra.mxu0 0.0
          %1005 = vmatprep.subr.mxu0 0.0
          %1006 = vmatpush2.msra.mxu0 0.0
          %1007 = vmatprep.subr.mxu0 0.0
          %1008 = vmatpush2.msra.mxu0 0.0
          %1009 = vmatprep.subr.mxu0 0.0
          %1010 = vmatpush2.msra.mxu0 0.0
          %1011 = vmatprep.subr.mxu0 0.0
          %1012 = vmatpush2.msra.mxu0 0.0
          %1013 = vmatprep.mubr.f32.mxu0 0.0
          %1014 = vmatmul.mubr.f32.gmra.mxu0 %v947
          %v1015 = vpop.f32.mrf.mxu0
          %v1016 = vadd.f32 0.0, %v1015
          %v1017 = vpop.f32.mrf.mxu0
          %1018 = vdwg.mxu0
          %v1020 = vsel %vm773, %v945, 0
          %1022 = vmatprep.subr.mxu0 0.0
          %1023 = vmatpush1.msra.mxu0 0.0
          %1024 = vmatprep.subr.mxu0 0.0
          %1025 = vmatpush1.msra.mxu0 0.0
          %1026 = vmatprep.subr.mxu0 0.0
          %1027 = vmatpush1.msra.mxu0 0.0
          %1028 = vmatprep.subr.mxu0 0.0
          %1029 = vmatpush1.msra.mxu0 0.0
          %1030 = vmatprep.subr.mxu0 0.0
          %1031 = vmatpush1.msra.mxu0 0.0
          %1032 = vmatprep.subr.mxu0 0.0
          %1033 = vmatpush1.msra.mxu0 0.0
          %1034 = vmatprep.subr.mxu0 0.0
          %1035 = vmatpush1.msra.mxu0 0.0
          %1036 = vmatprep.subr.mxu0 0.0
          %1037 = vmatpush1.msra.mxu0 0.0
          %1038 = vmatprep.subr.mxu0 0.0
          %1039 = vmatpush1.msra.mxu0 0.0
          %1040 = vmatprep.subr.mxu0 0.0
          %1041 = vmatpush1.msra.mxu0 0.0
          %1042 = vmatprep.subr.mxu0 0.0
          %1043 = vmatpush1.msra.mxu0 0.0
          %1044 = vmatprep.subr.mxu0 0.0
          %1045 = vmatpush1.msra.mxu0 0.0
          %1046 = vmatprep.subr.mxu0 0.0
          %1047 = vmatpush1.msra.mxu0 0.0
          %1048 = vmatprep.subr.mxu0 0.0
          %1049 = vmatpush1.msra.mxu0 0.0
          %1050 = vmatprep.subr.mxu0 0.0
          %1051 = vmatpush1.msra.mxu0 0.0
          %1052 = vmatprep.subr.mxu0 0.0
          %1053 = vmatpush1.msra.mxu0 %v772
          %1054 = vmatprep.subr.mxu0 0.0
          %1055 = vmatpush2.msra.mxu0 0.0
          %1056 = vmatprep.subr.mxu0 0.0
          %1057 = vmatpush2.msra.mxu0 0.0
          %1058 = vmatprep.subr.mxu0 0.0
          %1059 = vmatpush2.msra.mxu0 0.0
          %1060 = vmatprep.subr.mxu0 0.0
          %1061 = vmatpush2.msra.mxu0 0.0
          %1062 = vmatprep.subr.mxu0 0.0
          %1063 = vmatpush2.msra.mxu0 0.0
          %1064 = vmatprep.subr.mxu0 0.0
          %1065 = vmatpush2.msra.mxu0 0.0
          %1066 = vmatprep.subr.mxu0 0.0
          %1067 = vmatpush2.msra.mxu0 0.0
          %1068 = vmatprep.subr.mxu0 0.0
          %1069 = vmatpush2.msra.mxu0 0.0
          %1070 = vmatprep.subr.mxu0 0.0
          %1071 = vmatpush2.msra.mxu0 0.0
          %1072 = vmatprep.subr.mxu0 0.0
          %1073 = vmatpush2.msra.mxu0 0.0
          %1074 = vmatprep.subr.mxu0 0.0
          %1075 = vmatpush2.msra.mxu0 0.0
          %1076 = vmatprep.subr.mxu0 0.0
          %1077 = vmatpush2.msra.mxu0 0.0
          %1078 = vmatprep.subr.mxu0 0.0
          %1079 = vmatpush2.msra.mxu0 0.0
          %1080 = vmatprep.subr.mxu0 0.0
          %1081 = vmatpush2.msra.mxu0 0.0
          %1082 = vmatprep.subr.mxu0 0.0
          %1083 = vmatpush2.msra.mxu0 0.0
          %1084 = vmatprep.subr.mxu0 0.0
          %1085 = vmatpush2.msra.mxu0 0.0
          %1086 = vmatprep.mubr.f32.mxu0 0.0
          %1087 = vmatmul.mubr.f32.gmra.mxu0 %v1020
          %v1088 = vpop.f32.mrf.mxu0
          %v1089 = vadd.f32 0.0, %v1088
          %v1090 = vpop.f32.mrf.mxu0
          %1091 = vdwg.mxu0
          %v1092 = vlaneseq
          %v1093 = vshrl.u32 %v1092, 7
          %v1094 = vsub.s32 0, %v1093
          %v1095 = vrot.slane %v1016, %v1094
          %v1096 = vmul.f32 %v672, %v1095
          %v1097 = vmul.f32 %v673, %v1095
          %v1098 = vmul.f32 %v674, %v1095
          %v1099 = vmul.f32 %v675, %v1095
          %v1100 = vlaneseq
          %v1101 = vshrl.u32 %v1100, 7
          %v1102 = vsub.s32 0, %v1101
          %v1103 = vrot.slane %v1089, %v1102
          %v1104 = vadd.f32 %v1096, %v1103
          %v1105 = vadd.f32 %v1097, %v1103
          %v1106 = vadd.f32 %v1098, %v1103
          %v1107 = vadd.f32 %v1099, %v1103
          %v1108 = vxor.u32 %v1104, 2147483648
          %v1109 = vxor.u32 %v1105, 2147483648
          %v1110 = vxor.u32 %v1106, 2147483648
          %v1111 = vxor.u32 %v1107, 2147483648
          %v1112 = vmul.f32 %v1108, 1.442695
          %v1113 = vpow.pop %v1112
          %v1114 = vmul.f32 %v1109, 1.442695
          %v1115 = vpow.pop %v1114
          %v1116 = vmul.f32 %v1110, 1.442695
          %v1117 = vpow.pop %v1116
          %v1118 = vmul.f32 %v1111, 1.442695
          %v1119 = vpow.pop %v1118
          %v1120 = vadd.f32 %v1113, 1.0
          %v1121 = vadd.f32 %v1115, 1.0
          %v1122 = vadd.f32 %v1117, 1.0
          %v1123 = vadd.f32 %v1119, 1.0
          %v1124 = vrcp.pop %v1120
          %v1125 = vmul.f32 1.0, %v1124
          %v1126 = vrcp.pop %v1121
          %v1127 = vmul.f32 1.0, %v1126
          %v1128 = vrcp.pop %v1122
          %v1129 = vmul.f32 1.0, %v1128
          %v1130 = vrcp.pop %v1123
          %v1131 = vmul.f32 1.0, %v1130
          %v1132 = vmul.f32 %v1104, %v1125
          %v1133 = vmul.f32 %v1105, %v1127
          %v1134 = vmul.f32 %v1106, %v1129
          %v1135 = vmul.f32 %v1107, %v1131
          %1136 = vst [vmem:[#allocation7] sm:$0xff] %v1132
          %1137 = vst [vmem:[#allocation7 + $0x8] sm:$0xff] %v1133
          %1138 = vst [vmem:[#allocation7 + $0x10] sm:$0xff] %v1134
          %1139 = vst [vmem:[#allocation7 + $0x18] sm:$0xff] %v1135
        $region64: #{tpu_custom_call.1} parent=47 // pred_fallthru
          _
        // Predicated region
        $region65: #{tpu_custom_call.1} parent=47 // pred_check
          %p1140 = pneg %p190
        $region66: #{tpu_custom_call.1} parent=47 // pred_check_branch
          %1142 = sbr.rel (%p1140) target = $region68
        $region67: #{tpu_custom_call.1} parent=47 // pred_region
          %s1144 = ssub.s32 512, 512
          %1145 = vsyncadd [#allocation4], %s1144
          %s1146 = sshll.u32 [#allocation7], 4
          %s1147 = int_to_ptr.vmem [resolvable:$true] %s1146
          %1152 = dma.vmem_to_hbm [thread:$0]  %s1147, 512, %s7, [#allocation4], 128, 128, 8
        $region68: #{tpu_custom_call.1} parent=47 // pred_fallthru
          _
        // Predicated region
        $region69: #{tpu_custom_call.1} parent=47 // pred_check
          %p1153 = pneg %p190
        $region70: #{tpu_custom_call.1} parent=47 // pred_check_branch
          %1155 = sbr.rel (%p1153) target = $region72
        $region71: #{tpu_custom_call.1} parent=47 // pred_region
          %1156 = dma.done [#allocation4], 512
        $region72: #{tpu_custom_call.1} parent=47 // pred_fallthru
          _
      $region48: #{tpu_custom_call.1} parent=5 // pred_fallthru
        _
      %p1157 = scmp.le.s32.totalorder 2, %s16
      // Predicated region
      $region73: #{tpu_custom_call.1} parent=5 // pred_check
        %p1158 = pneg %p1157
      $region74: #{tpu_custom_call.1} parent=5 // pred_check_branch
        %1160 = sbr.rel (%p1158) target = $region76
      $region75: #{tpu_custom_call.1} parent=5 // pred_region
        %s1161 = ssub.s32 %s16, 2
      $region76: #{tpu_custom_call.1} parent=5 // pred_fallthru
        _
    $region6: #{tpu_custom_call.1} parent=1 // loop_footer
      %s20 = sadd.s32 1, %s16
    $region7: #{tpu_custom_call.1} parent=1 // loop_footer_branch
      %15 = sbr.rel target = $region3
    $region8: #{tpu_custom_call.1} parent=1 // loop_exit
      _
    %1162 = vsyncpa [#allocation3], 1
    %s1163 = scalar_lea.sflag [#allocation3], 1
    %1164 = vsyncpa %s1163, 1
    %1165 = vsyncpa [#allocation6], 1
    %1166 = vsyncpa [#allocation4], 1
    %s1167 = scalar_lea.sflag [#allocation4], 1
    %1168 = vsyncpa %s1167, 1

</llo_original>
